<compile_context>
chip_gen: v7x
topology: tpu7x:2x2x1
jax: 0.10.0
libtpu: 0.0.40
codegen_flags: <defaults>
</compile_context>

<pallas_src>
import functools

import jax
import jax.numpy as jnp
from jax import lax
from jax.experimental import pallas as pl
from jax.experimental.pallas import tpu as pltpu


def _flash_attn_kernel(xn_ref, xm_ref, wqv_ref, wk_ref, gamma_ref, o_ref,
                       k_sc, m_sc, l_sc, acc_sc,
                       *, n_valid, tn, cq_pad, c, mxu_dtype):
    """One (batch, output-column-tile) block; streams the softmax over n tiles.

    torch semantics: scores[i, j] = sum_c q[c, i] * k[c, j];
    softmax over i (dim=1); out[c, j] = sum_i v[c, i] * p[i, j].
    Here j == output/lane tile (grid axis 1, parallel), i == streamed tile
    (grid axis 2, arbitrary / last).
    """
    n = pl.program_id(2)
    n_last = pl.num_programs(2) - 1

    @pl.when(n == 0)
    def _init():
        m_sc[...] = jnp.full_like(m_sc, -jnp.inf)
        l_sc[...] = jnp.zeros_like(l_sc)
        acc_sc[...] = jnp.zeros_like(acc_sc)
        # Key projection of this output tile: k = [Wk | bk] @ x_aug -> (Cq_pad, tm).
        k = jnp.dot(wk_ref[...], xm_ref[0], preferred_element_type=jnp.float32)
        k_sc[...] = k.astype(k_sc.dtype)

    # Fused query/value projection of the streamed tile; bias folded in via the
    # constant-1 row of x_aug:  proj = [[Wq|bq]; [Wv|bv]] @ x_n_aug.
    proj = jnp.dot(wqv_ref[...], xn_ref[0],
                   preferred_element_type=jnp.float32)           # (Cq_pad + C, tn) f32
    q = proj[0:cq_pad, :].astype(mxu_dtype)                      # (Cq_pad, tn)
    v = proj[cq_pad:cq_pad + c, :].astype(mxu_dtype)             # (C, tn)

    # scores block (tn, tm); lhs contracted on dim 0.
    # NOTE: at realistic N verify via pl.lower_as_mlir that the (Cq_pad, tn)
    # relayout stays on the otherwise-idle XLU, not on the critical path.
    s = lax.dot_general(q, k_sc[...], (((0,), (0,)), ((), ())),
                        preferred_element_type=jnp.float32)      # (tn, tm) f32

    # Mask padded query rows (i >= N).  Padding only ever lands in the last n
    # tile; this is a single per-block compare+select, emitted only if needed.
    if n_valid % tn != 0:
        row = n * tn + lax.broadcasted_iota(jnp.int32, (tn, 1), 0)
        s = jnp.where(row < n_valid, s, jnp.float32(-1e30))

    # Online softmax over the streamed axis (all stats in f32).
    m_prev = m_sc[...]                                           # (1, tm)
    m_new = jnp.maximum(m_prev, jnp.max(s, axis=0, keepdims=True))
    alpha = jnp.exp(m_prev - m_new)                              # (1, tm)
    p = jnp.exp(s - m_new)                                       # (tn, tm) f32
    l_sc[...] = alpha * l_sc[...] + jnp.sum(p, axis=0, keepdims=True)
    acc_sc[...] = alpha * acc_sc[...] + jnp.dot(
        v, p.astype(mxu_dtype), preferred_element_type=jnp.float32)   # (C, tm) f32
    m_sc[...] = m_new

    @pl.when(n == n_last)
    def _finalize():
        # EUP approx reciprocal + one Newton step (essentially free; keeps the
        # denominator error well below the bf16-operand error floor).
        l = l_sc[...]
        r = pl.reciprocal(l, approx=True)
        r = r * (2.0 - l * r)
        out = acc_sc[...] * r                                    # (C, tm) f32
        gamma = gamma_ref[0]
        x_res = xm_ref[0, 0:c, :].astype(jnp.float32)            # residual (drop 1-row)
        o_ref[0] = (gamma * out + x_res).astype(o_ref.dtype)


def _vmem_capacity_bytes():
    # Per-generation physical VMEM (v5e/v6e: 128 MiB, v7x: 64 MiB per TC).
    try:
        return int(pltpu.get_tpu_info().vmem_capacity_bytes)
    except Exception:
        return 64 << 20   # conservative fallback (v7x per-TensorCore VMEM)


def _pick_tile(np_pad, cap=512):
    for t in (512, 384, 256, 128):
        if t <= cap and np_pad % t == 0:
            return t
    return 128


@jax.jit
def self_attention_pallas(x, wq, bq, wk, bk, wv, bv, gamma):
    B, C, H, W = x.shape
    N = H * W
    Cq = wq.shape[0]

    Np = max(128, pl.cdiv(N, 128) * 128)        # lane-dense spatial axis
    Cq_pad = max(8, pl.cdiv(Cq, 8) * 8)         # sublane-aligned q/k channel rows
    Ca = C + 1                                  # +1 constant row folds the biases in
    Cqv = Cq_pad + C

    tm = _pick_tile(Np)                         # output-column (lane) tile
    tn = _pick_tile(Np)                         # streamed softmax/contraction tile

    # bf16 MXU operands for the big matmuls when x is f32 (f32 acc everywhere).
    mxu_dtype = jnp.bfloat16 if x.dtype == jnp.float32 else x.dtype

    # Fused [q; v] projection weights with the bias as an extra column, plus the
    # k projection (padded q-channel rows are zero => zero score contribution).
    wdt = x.dtype
    w_qv = jnp.zeros((Cqv, Ca), wdt)
    w_qv = w_qv.at[0:Cq, 0:C].set(wq.astype(wdt))
    w_qv = w_qv.at[0:Cq, C].set(bq.astype(wdt))
    w_qv = w_qv.at[Cq_pad:Cq_pad + C, 0:C].set(wv.astype(wdt))
    w_qv = w_qv.at[Cq_pad:Cq_pad + C, C].set(bv.astype(wdt))

    w_k = jnp.zeros((Cq_pad, Ca), wdt)
    w_k = w_k.at[0:Cq, 0:C].set(wk.astype(wdt))
    w_k = w_k.at[0:Cq, C].set(bk.astype(wdt))

    # Flatten, zero-pad the spatial axis to Np lanes, append the constant-1 row.
    x_flat = x.reshape(B, C, N)
    if Np != N:
        x_flat = jnp.pad(x_flat, ((0, 0), (0, 0), (0, Np - N)))
    x_aug = jnp.concatenate([x_flat, jnp.ones((B, 1, Np), x.dtype)], axis=1)

    gamma_arr = jnp.asarray(gamma, jnp.float32).reshape(1)

    # VMEM budget: flash-tile temporaries + double-buffered blocks + scratch,
    # clamped to ~80% of this generation's per-core VMEM.
    isz = jnp.dtype(x.dtype).itemsize
    msz = jnp.dtype(mxu_dtype).itemsize
    vmem_est = (
        4 * tn * tm * 4                           # s / p (+ cast copies)
        + 2 * 2 * Ca * (tn + tm) * isz            # double-buffered x_n / x_m blocks
        + 2 * C * tm * isz                        # double-buffered out block
        + (C + 2) * tm * 4 + Cq_pad * tm * msz    # acc + running m/l + k scratch
        + 2 * (Cqv + Cq_pad) * Ca * isz           # fused weights
        + 4 * Cqv * tn * 4                        # projection temporaries
        + (4 << 20)                               # slack for Mosaic internals
    )
    vmem_limit = min(max(int(vmem_est), 16 << 20),
                     int(0.8 * _vmem_capacity_bytes()))

    kernel = functools.partial(
        _flash_attn_kernel,
        n_valid=N, tn=tn, cq_pad=Cq_pad, c=C, mxu_dtype=mxu_dtype)

    out_flat = pl.pallas_call(
        kernel,
        out_shape=jax.ShapeDtypeStruct((B, C, Np), x.dtype),
        grid_spec=pltpu.PrefetchScalarGridSpec(
            num_scalar_prefetch=0,
            grid=(B, Np // tm, Np // tn),
            in_specs=[
                # x_aug tile along the streamed (softmax) axis -> q / v projection.
                pl.BlockSpec((1, Ca, tn), lambda b, m, n: (b, 0, n)),
                # x_aug tile along the output-column axis -> k projection + residual.
                # n-invariant index, so it is fetched once per (b, m) visit.
                pl.BlockSpec((1, Ca, tm), lambda b, m, n: (b, 0, m)),
                # Grid-invariant fused weights (fetched once).
                pl.BlockSpec((Cqv, Ca), lambda b, m, n: (0, 0)),
                pl.BlockSpec((Cq_pad, Ca), lambda b, m, n: (0, 0)),
                # gamma scalar in SMEM.
                pl.BlockSpec(memory_space=pltpu.MemorySpace.SMEM),
            ],
            out_specs=pl.BlockSpec((1, C, tm), lambda b, m, n: (b, 0, m)),
            scratch_shapes=[
                pltpu.VMEM((Cq_pad, tm), mxu_dtype),    # k tile for this m block
                pltpu.VMEM((1, tm), jnp.float32),       # running max
                pltpu.VMEM((1, tm), jnp.float32),       # running sum
                pltpu.VMEM((C, tm), jnp.float32),       # output accumulator
            ],
        ),
        compiler_params=pltpu.CompilerParams(
            dimension_semantics=("parallel", "parallel", "arbitrary"),
            vmem_limit_bytes=vmem_limit),
    )(x_aug, x_aug, w_qv, w_k, gamma_arr)

    return out_flat[:, :, :N].reshape(B, C, H, W)


def _spectral_normalize(w):
    # nn.utils.spectral_norm divides the weight by its largest singular value
    # (power iteration in PyTorch; computed exactly here for synthetic weights).
    sigma = jnp.linalg.norm(w.reshape(w.shape[0], -1), ord=2)
    return w / sigma


def _reference(x, wq, bq, wk, bk, wv, bv, gamma):
    # Pure-JAX f32 reference of the PyTorch SelfAttention.forward.
    B, C, H, W = x.shape
    N = H * W
    xf = x.reshape(B, C, N).astype(jnp.float32)
    q = jnp.einsum("oc,bcn->bon", wq, xf) + bq[None, :, None]   # (B, Cq, N)
    k = jnp.einsum("oc,bcn->bon", wk, xf) + bk[None, :, None]   # (B, Cq, N)
    v = jnp.einsum("oc,bcn->bon", wv, xf) + bv[None, :, None]   # (B, C, N)
    qk = jnp.einsum("bcn,bcm->bnm", q, k)                        # (B, N, N)
    attn = jax.nn.softmax(qk, axis=1)                            # torch dim=1
    out = jnp.einsum("bcn,bnm->bcm", v, attn)                    # (B, C, N)
    return (gamma * out + xf).reshape(B, C, H, W).astype(x.dtype)


if __name__ == "__main__":
    key = jax.random.PRNGKey(0)
    B, C, H, W = 2, 32, 8, 8          # in_channel=32 -> query/key channels = 4
    Cq = C // 8

    keys = jax.random.split(key, 8)
    x = jax.random.normal(keys[0], (B, C, H, W), jnp.float32)

    # Conv1d(k=1) weights (out, in, 1) collapsed to (out, in); spectral-normalized.
    wq = _spectral_normalize(0.1 * jax.random.normal(keys[1], (Cq, C), jnp.float32))
    wk = _spectral_normalize(0.1 * jax.random.normal(keys[2], (Cq, C), jnp.float32))
    wv = _spectral_normalize(0.1 * jax.random.normal(keys[3], (C, C), jnp.float32))
    bq = 0.1 * jax.random.normal(keys[4], (Cq,), jnp.float32)
    bk = 0.1 * jax.random.normal(keys[5], (Cq,), jnp.float32)
    bv = 0.1 * jax.random.normal(keys[6], (C,), jnp.float32)
    # Module __init__ sets gamma = 0.0; use a nonzero synthetic value so the
    # attention path is actually exercised.
    gamma = jnp.float32(0.5)

    out = self_attention_pallas(x, wq, bq, wk, bk, wv, bv, gamma)
    out = jax.block_until_ready(out)

    ref = _reference(x, wq, bq, wk, bk, wv, bv, gamma)
    assert out.shape == x.shape
    # Tolerance accounts for bf16 MXU operands (f32 accumulation) and the
    # EUP approx-reciprocal (+ Newton step) softmax denominator.
    err = jnp.max(jnp.abs(out - ref))
    assert jnp.allclose(out, ref, atol=1e-2, rtol=1e-2), f"max err {err}"
    print("KERNEL_OK")
</pallas_src>

<mosaic_0001>
module attributes {stable_mosaic.version = 11 : i64} {
  func.func @_flash_attn_kernel(%arg0: i32, %arg1: i32, %arg2: i32, %arg3: memref<1x33x128xf32, #tpu.memory_space<vmem>>, %arg4: memref<1x33x128xf32, #tpu.memory_space<vmem>>, %arg5: memref<40x33xf32, #tpu.memory_space<vmem>>, %arg6: memref<8x33xf32, #tpu.memory_space<vmem>>, %arg7: memref<1xf32, #tpu.memory_space<smem>>, %arg8: memref<1x32x128xf32, #tpu.memory_space<vmem>>, %arg9: memref<8x128xbf16, #tpu.memory_space<vmem>>, %arg10: memref<1x128xf32, #tpu.memory_space<vmem>>, %arg11: memref<1x128xf32, #tpu.memory_space<vmem>>, %arg12: memref<32x128xf32, #tpu.memory_space<vmem>>) attributes {dimension_semantics = [#tpu.dimension_semantics<parallel>, #tpu.dimension_semantics<parallel>, #tpu.dimension_semantics<arbitrary>], iteration_bounds = array<i64: 2, 1, 1>, scalar_prefetch = 0 : i64, scratch_operands = 4 : i64, tpu.core_type = #tpu.core_type<tc>, window_params = [{transform_indices = @transform_0, window_bounds = array<i64: 1, 33, 128>}, {transform_indices = @transform_1, window_bounds = array<i64: 1, 33, 128>}, {pipeline_mode = #tpu.pipeline_mode<synchronous>, transform_indices = @transform_2, window_bounds = array<i64: 40, 33>}, {pipeline_mode = #tpu.pipeline_mode<synchronous>, transform_indices = @transform_3, window_bounds = array<i64: 8, 33>}, {transform_indices = @transform_4, window_bounds = array<i64: 1>}, {transform_indices = @transform_5, window_bounds = array<i64: 1, 32, 128>}]} {
    %c0_i32 = arith.constant 0 : i32
    %0 = arith.cmpi eq, %arg2, %c0_i32 : i32
    %1 = arith.extui %0 : i1 to i32
    %c0_i32_0 = arith.constant 0 : i32
    %2 = arith.cmpi ne, %1, %c0_i32_0 : i32
    scf.if %2 {
      %cst_26 = arith.constant 0xFF800000 : f32
      %49 = vector.broadcast %cst_26 : f32 to vector<1x128xf32>
      %c0_27 = arith.constant 0 : index
      %c0_28 = arith.constant 0 : index
      %50 = vector.load %arg10[%c0_27, %c0_28] : memref<1x128xf32, #tpu.memory_space<vmem>>, vector<1x128xf32>
      tpu.vector_store %arg10[%c0_27, %c0_28], %49 {strides = array<i32>} : memref<1x128xf32, #tpu.memory_space<vmem>>, vector<1x128xf32>,
      %cst_29 = arith.constant 0.000000e+00 : f32
      %51 = vector.broadcast %cst_29 : f32 to vector<1x128xf32>
      %c0_30 = arith.constant 0 : index
      %c0_31 = arith.constant 0 : index
      %52 = vector.load %arg11[%c0_30, %c0_31] : memref<1x128xf32, #tpu.memory_space<vmem>>, vector<1x128xf32>
      tpu.vector_store %arg11[%c0_30, %c0_31], %51 {strides = array<i32>} : memref<1x128xf32, #tpu.memory_space<vmem>>, vector<1x128xf32>,
      %cst_32 = arith.constant 0.000000e+00 : f32
      %53 = vector.broadcast %cst_32 : f32 to vector<32x128xf32>
      %c0_33 = arith.constant 0 : index
      %c0_34 = arith.constant 0 : index
      %54 = vector.load %arg12[%c0_33, %c0_34] : memref<32x128xf32, #tpu.memory_space<vmem>>, vector<32x128xf32>
      tpu.vector_store %arg12[%c0_33, %c0_34], %53 {strides = array<i32>} : memref<32x128xf32, #tpu.memory_space<vmem>>, vector<32x128xf32>,
      %c0_35 = arith.constant 0 : index
      %c0_36 = arith.constant 0 : index
      %55 = vector.load %arg6[%c0_35, %c0_36] : memref<8x33xf32, #tpu.memory_space<vmem>>, vector<8x33xf32>
      %c0_37 = arith.constant 0 : index
      %c0_38 = arith.constant 0 : index
      %c0_39 = arith.constant 0 : index
      %56 = vector.load %arg4[%c0_37, %c0_38, %c0_39] : memref<1x33x128xf32, #tpu.memory_space<vmem>>, vector<1x33x128xf32>
      %57 = vector.shape_cast %56 : vector<1x33x128xf32> to vector<33x128xf32>
      %cst_40 = arith.constant dense<0.000000e+00> : vector<8x128xf32>
      %58 = tpu.matmul %55, %57, %cst_40 {dimension_numbers = #tpu.dot_dimension_numbers<[1], [0], [0], [1], [0, 0, 1, 1], [], []>} : vector<8x33xf32>, vector<33x128xf32>, vector<8x128xf32> -> vector<8x128xf32>
      %59 = arith.truncf %58 : vector<8x128xf32> to vector<8x128xbf16>
      %c0_41 = arith.constant 0 : index
      %c0_42 = arith.constant 0 : index
      %60 = vector.load %arg9[%c0_41, %c0_42] : memref<8x128xbf16, #tpu.memory_space<vmem>>, vector<8x128xbf16>
      tpu.vector_store %arg9[%c0_41, %c0_42], %59 {strides = array<i32>} : memref<8x128xbf16, #tpu.memory_space<vmem>>, vector<8x128xbf16>,
    } else {
    }
    %c0 = arith.constant 0 : index
    %c0_1 = arith.constant 0 : index
    %3 = vector.load %arg5[%c0, %c0_1] : memref<40x33xf32, #tpu.memory_space<vmem>>, vector<40x33xf32>
    %c0_2 = arith.constant 0 : index
    %c0_3 = arith.constant 0 : index
    %c0_4 = arith.constant 0 : index
    %4 = vector.load %arg3[%c0_2, %c0_3, %c0_4] : memref<1x33x128xf32, #tpu.memory_space<vmem>>, vector<1x33x128xf32>
    %5 = vector.shape_cast %4 : vector<1x33x128xf32> to vector<33x128xf32>
    %cst = arith.constant dense<0.000000e+00> : vector<40x128xf32>
    %6 = tpu.matmul %3, %5, %cst {dimension_numbers = #tpu.dot_dimension_numbers<[1], [0], [0], [1], [0, 0, 1, 1], [], []>} : vector<40x33xf32>, vector<33x128xf32>, vector<40x128xf32> -> vector<40x128xf32>
    %7 = vector.extract_strided_slice %6 {offsets = [0, 0], sizes = [8, 128], strides = [1, 1]} : vector<40x128xf32> to vector<8x128xf32>
    %8 = arith.truncf %7 : vector<8x128xf32> to vector<8x128xbf16>
    %9 = vector.extract_strided_slice %6 {offsets = [8, 0], sizes = [32, 128], strides = [1, 1]} : vector<40x128xf32> to vector<32x128xf32>
    %10 = arith.truncf %9 : vector<32x128xf32> to vector<32x128xbf16>
    %c0_5 = arith.constant 0 : index
    %c0_6 = arith.constant 0 : index
    %11 = vector.load %arg9[%c0_5, %c0_6] : memref<8x128xbf16, #tpu.memory_space<vmem>>, vector<8x128xbf16>
    %cst_7 = arith.constant dense<0.000000e+00> : vector<128x128xf32>
    %12 = tpu.matmul %8, %11, %cst_7 {dimension_numbers = #tpu.dot_dimension_numbers<[0], [0], [1], [1], [0, 1, 1, 1], [], []>} : vector<8x128xbf16>, vector<8x128xbf16>, vector<128x128xf32> -> vector<128x128xf32>
    %c128_i32 = arith.constant 128 : i32
    %13 = arith.muli %arg2, %c128_i32 : i32
    %14 = tpu.iota {dimensions = array<i32: 0>} : vector<128x1xi32>
    %15 = vector.broadcast %13 : i32 to vector<128x1xi32>
    %16 = arith.addi %15, %14 : vector<128x1xi32>
    %c64_i32 = arith.constant 64 : i32
    %17 = vector.broadcast %c64_i32 : i32 to vector<128x1xi32>
    %18 = arith.cmpi slt, %16, %17 : vector<128x1xi32>
    %cst_8 = arith.constant -1.000000e+30 : f32
    %19 = vector.shape_cast %18 : vector<128x1xi1> to vector<128x1xi1>
    %20 = vector.broadcast %19 : vector<128x1xi1> to vector<128x128xi1>
    %21 = vector.broadcast %cst_8 : f32 to vector<128x128xf32>
    %22 = arith.select %20, %12, %21 : vector<128x128xi1>, vector<128x128xf32>
    %c0_9 = arith.constant 0 : index
    %c0_10 = arith.constant 0 : index
    %23 = vector.load %arg10[%c0_9, %c0_10] : memref<1x128xf32, #tpu.memory_space<vmem>>, vector<1x128xf32>
    %cst_11 = arith.constant dense<0xFF800000> : vector<128xf32>
    %24 = vector.multi_reduction <maximumf>, %22, %cst_11 [0] : vector<128x128xf32> to vector<128xf32>
    %25 = vector.shape_cast %24 : vector<128xf32> to vector<1x128xf32>
    %26 = arith.maximumf %23, %25 : vector<1x128xf32>
    %27 = arith.subf %23, %26 : vector<1x128xf32>
    %28 = math.exp %27 : vector<1x128xf32>
    %29 = vector.broadcast %26 : vector<1x128xf32> to vector<128x128xf32>
    %30 = arith.subf %22, %29 : vector<128x128xf32>
    %31 = math.exp %30 : vector<128x128xf32>
    %c0_12 = arith.constant 0 : index
    %c0_13 = arith.constant 0 : index
    %32 = vector.load %arg11[%c0_12, %c0_13] : memref<1x128xf32, #tpu.memory_space<vmem>>, vector<1x128xf32>
    %33 = arith.mulf %28, %32 : vector<1x128xf32>
    %cst_14 = arith.constant dense<0.000000e+00> : vector<128xf32>
    %34 = vector.multi_reduction <add>, %31, %cst_14 [0] : vector<128x128xf32> to vector<128xf32>
    %35 = vector.shape_cast %34 : vector<128xf32> to vector<1x128xf32>
    %36 = arith.addf %33, %35 : vector<1x128xf32>
    %c0_15 = arith.constant 0 : index
    %c0_16 = arith.constant 0 : index
    %37 = vector.load %arg11[%c0_15, %c0_16] : memref<1x128xf32, #tpu.memory_space<vmem>>, vector<1x128xf32>
    tpu.vector_store %arg11[%c0_15, %c0_16], %36 {strides = array<i32>} : memref<1x128xf32, #tpu.memory_space<vmem>>, vector<1x128xf32>,
    %c0_17 = arith.constant 0 : index
    %c0_18 = arith.constant 0 : index
    %38 = vector.load %arg12[%c0_17, %c0_18] : memref<32x128xf32, #tpu.memory_space<vmem>>, vector<32x128xf32>
    %39 = vector.broadcast %28 : vector<1x128xf32> to vector<32x128xf32>
    %40 = arith.mulf %39, %38 : vector<32x128xf32>
    %41 = arith.truncf %31 : vector<128x128xf32> to vector<128x128xbf16>
    %cst_19 = arith.constant dense<0.000000e+00> : vector<32x128xf32>
    %42 = tpu.matmul %10, %41, %cst_19 {dimension_numbers = #tpu.dot_dimension_numbers<[1], [0], [0], [1], [0, 0, 1, 1], [], []>} : vector<32x128xbf16>, vector<128x128xbf16>, vector<32x128xf32> -> vector<32x128xf32>
    %43 = arith.addf %40, %42 : vector<32x128xf32>
    %c0_20 = arith.constant 0 : index
    %c0_21 = arith.constant 0 : index
    %44 = vector.load %arg12[%c0_20, %c0_21] : memref<32x128xf32, #tpu.memory_space<vmem>>, vector<32x128xf32>
    tpu.vector_store %arg12[%c0_20, %c0_21], %43 {strides = array<i32>} : memref<32x128xf32, #tpu.memory_space<vmem>>, vector<32x128xf32>,
    %c0_22 = arith.constant 0 : index
    %c0_23 = arith.constant 0 : index
    %45 = vector.load %arg10[%c0_22, %c0_23] : memref<1x128xf32, #tpu.memory_space<vmem>>, vector<1x128xf32>
    tpu.vector_store %arg10[%c0_22, %c0_23], %26 {strides = array<i32>} : memref<1x128xf32, #tpu.memory_space<vmem>>, vector<1x128xf32>,
    %c0_i32_24 = arith.constant 0 : i32
    %46 = arith.cmpi eq, %arg2, %c0_i32_24 : i32
    %47 = arith.extui %46 : i1 to i32
    %c0_i32_25 = arith.constant 0 : i32
    %48 = arith.cmpi ne, %47, %c0_i32_25 : i32
    scf.if %48 {
      %c0_26 = arith.constant 0 : index
      %c0_27 = arith.constant 0 : index
      %49 = vector.load %arg11[%c0_26, %c0_27] : memref<1x128xf32, #tpu.memory_space<vmem>>, vector<1x128xf32>
      %50 = tpu.reciprocal %49 {approx = true} : vector<1x128xf32> -> vector<1x128xf32>
      %51 = arith.mulf %49, %50 : vector<1x128xf32>
      %cst_28 = arith.constant 2.000000e+00 : f32
      %52 = vector.broadcast %cst_28 : f32 to vector<1x128xf32>
      %53 = arith.subf %52, %51 : vector<1x128xf32>
      %54 = arith.mulf %50, %53 : vector<1x128xf32>
      %c0_29 = arith.constant 0 : index
      %c0_30 = arith.constant 0 : index
      %55 = vector.load %arg12[%c0_29, %c0_30] : memref<32x128xf32, #tpu.memory_space<vmem>>, vector<32x128xf32>
      %56 = vector.broadcast %54 : vector<1x128xf32> to vector<32x128xf32>
      %57 = arith.mulf %55, %56 : vector<32x128xf32>
      %c0_31 = arith.constant 0 : index
      %58 = memref.load %arg7[%c0_31] : memref<1xf32, #tpu.memory_space<smem>>
      %c0_32 = arith.constant 0 : index
      %c0_33 = arith.constant 0 : index
      %c0_34 = arith.constant 0 : index
      %59 = vector.load %arg4[%c0_32, %c0_33, %c0_34] : memref<1x33x128xf32, #tpu.memory_space<vmem>>, vector<1x32x128xf32>
      %60 = vector.shape_cast %59 : vector<1x32x128xf32> to vector<32x128xf32>
      %61 = vector.broadcast %58 : f32 to vector<32x128xf32>
      %62 = arith.mulf %61, %57 : vector<32x128xf32>
      %63 = arith.addf %62, %60 : vector<32x128xf32>
      %c0_35 = arith.constant 0 : index
      %c0_36 = arith.constant 0 : index
      %c0_37 = arith.constant 0 : index
      %64 = vector.load %arg8[%c0_35, %c0_36, %c0_37] : memref<1x32x128xf32, #tpu.memory_space<vmem>>, vector<1x32x128xf32>
      %65 = vector.shape_cast %64 : vector<1x32x128xf32> to vector<32x128xf32>
      %66 = vector.shape_cast %63 : vector<32x128xf32> to vector<1x32x128xf32>
      tpu.vector_store %arg8[%c0_35, %c0_36, %c0_37], %66 {strides = array<i32>} : memref<1x32x128xf32, #tpu.memory_space<vmem>>, vector<1x32x128xf32>,
    } else {
    }
    return
  }
  func.func @transform_0(%arg0: i32, %arg1: i32, %arg2: i32) -> (i32, i32, i32) {
    %c0_i32 = arith.constant 0 : i32
    %c0_i32_0 = arith.constant 0 : i32
    return %arg0, %c0_i32, %arg2 : i32, i32, i32
  }
  func.func @transform_1(%arg0: i32, %arg1: i32, %arg2: i32) -> (i32, i32, i32) {
    %c0_i32 = arith.constant 0 : i32
    %c0_i32_0 = arith.constant 0 : i32
    return %arg0, %c0_i32, %arg1 : i32, i32, i32
  }
  func.func @transform_2(%arg0: i32, %arg1: i32, %arg2: i32) -> (i32, i32) {
    %c0_i32 = arith.constant 0 : i32
    %c0_i32_0 = arith.constant 0 : i32
    %c0_i32_1 = arith.constant 0 : i32
    return %c0_i32, %c0_i32_0 : i32, i32
  }
  func.func @transform_3(%arg0: i32, %arg1: i32, %arg2: i32) -> (i32, i32) {
    %c0_i32 = arith.constant 0 : i32
    %c0_i32_0 = arith.constant 0 : i32
    %c0_i32_1 = arith.constant 0 : i32
    return %c0_i32, %c0_i32_0 : i32, i32
  }
  func.func @transform_4(%arg0: i32, %arg1: i32, %arg2: i32) -> i32 {
    %c0_i32 = arith.constant 0 : i32
    %c0_i32_0 = arith.constant 0 : i32
    return %c0_i32 : i32
  }
  func.func @transform_5(%arg0: i32, %arg1: i32, %arg2: i32) -> (i32, i32, i32) {
    %c0_i32 = arith.constant 0 : i32
    %c0_i32_0 = arith.constant 0 : i32
    return %arg0, %c0_i32, %arg1 : i32, i32, i32
  }
}

</mosaic_0001>

<llo_original>
// kernel: self_attention_pallas.1
$region0: #{self_attention_pallas.1}
  #allocation0 [shape = 'u32[]', space=smem, size = 0x4, offset = 0x4, fixed_abs, tag = 'smem constant byte address 0x4 - core index']
  #allocation1 [shape = 'u32[144,128]{1,0:T(1,128)}', space=vmem, size = 0x12000, scoped, tag = 'internal scratch']
  #allocation2 [shape = 'bf16[8,128]{1,0:T(8,128)(2,1)}', space=vmem, size = 0x800, scoped, tag = 'scratch operand']
  #allocation3 [shape = 'f32[1,128]{1,0:T(1,128)}', space=vmem, size = 0x200, scoped, tag = 'scratch operand']
  #allocation4 [shape = 'f32[1,128]{1,0:T(1,128)}', space=vmem, size = 0x200, scoped, tag = 'scratch operand']
  #allocation5 [shape = 'f32[32,128]{1,0:T(8,128)}', space=vmem, size = 0x4000, scoped, tag = 'scratch operand']
  #allocation6 [shape = 'f32[1]{0:T(128)S(6)}', space=smem, size = 0x200, scoped, tag = 'scoped memory for self_attention_pallas.1']
  %s0 = inlined_call_operand.vmem [shape: f32[2,33,128], index: 0, kind: input, shape index: {}, may-alias: {0,1}]
  %s1 = inlined_call_operand.vmem [shape: f32[2,33,128], index: 1, kind: input, shape index: {}, may-alias: {0,1}]
  %s2 = inlined_call_operand.vmem [shape: f32[40,33], index: 2, kind: input, shape index: {}]
  %s3 = inlined_call_operand.vmem [shape: f32[8,33], index: 3, kind: input, shape index: {}]
  %s4 = inlined_call_operand.<no memory space> [shape: f32[1], index: 4, kind: input, shape index: {}]
  %s5 = inlined_call_operand.vmem [shape: f32[2,32,128], index: 5, kind: output, shape index: {}]
  %s6 = sld [smem:[#allocation0]]
  $region61: #{self_attention_pallas.1} parent=0
    _
  %s8 = ssub.s32 1, %s6
  %s9 = scalar_select 0, %s8, %s6
  %10 = sst [smem:[#allocation6]] %s4
  loop: start=0, step=1, limit=4
  $region2: #{self_attention_pallas.1} parent=0 // loop_pre_header
    _
  $region3: #{self_attention_pallas.1} parent=0 // loop_header
    %s12 = sphi 0, %s16
    %p13 = scmp.ge.s32.totalorder %s12, 4
    %s19 = sphi 0, %s38
    %s20 = sphi 0, %s34
    %s21 = sphi 0, %s30
    %s22 = sphi 0, %s19
    %s23 = sphi 0, %s20
    %s24 = sphi 0, %s21
    %s25 = sphi 0, %s22
    %s26 = sphi 0, %s23
    %s27 = sphi 0, %s24
    %s43 = sphi 0, %s45
    %s46 = sphi 0, %s43
    %s47 = sphi 0, %s46
    %s63 = sphi 0, %s47
    %s71 = sphi 0, %s73
    %s74 = sphi 0, %s71
    %s75 = sphi 0, %s74
    %s91 = sphi 0, %s75
    %s95 = sphi 0, %s95
    %s97 = sphi 0, %s95
    %s98 = sphi 0, %s97
    %s112 = sphi 0, %s98
    %s116 = sphi 0, %s116
    %s118 = sphi 0, %s116
    %s119 = sphi 0, %s118
    %s133 = sphi 0, %s119
    %s137 = sphi 0, %s137
    %s139 = sphi 0, %s137
    %s140 = sphi 0, %s139
    %s154 = sphi 0, %s140
    %s162 = sphi 0, %s164
    %s165 = sphi 0, %s162
    %s166 = sphi 0, %s165
    %s182 = sphi 0, %s166
  $region4: #{self_attention_pallas.1} parent=0 // loop_header_branch
    %15 = sbr.rel (%p13) target = $region8
  $region5: #{self_attention_pallas.1} parent=0 // loop_body
    %s17 = ssub.s32 %s12, 1
    %s18 = ssub.s32 %s12, 2
    %s28 = sadd.s32 1, %s21
    %p29 = scmp.ge.s32.totalorder %s28, 1
    %s30 = scalar_select %p29, 0, %s28
    %s31 = sadd.s32 1, %s20
    %s32 = scalar_select %p29, %s31, %s20
    %p33 = scmp.ge.s32.totalorder %s32, 1
    %s34 = scalar_select %p33, 0, %s32
    %s35 = sadd.s32 1, %s19
    %s36 = scalar_select %p33, %s35, %s19
    %p37 = scmp.ge.s32.totalorder %s36, 2
    %s38 = scalar_select %p37, 0, %s36
    %s39 = ssub.s32 %s19, %s38
    %s40 = ssub.s32 %s21, %s30
    %s41 = sor.u32 %s39, %s40
    %p42 = scmp.eq.s32.totalorder %s41, 0
    %s44 = sadd.s32 %s43, 1
    %s45 = scalar_select %p42, %s43, %s44
    %p48 = pneg %p42
    %p49 = scmp.eq.s32.totalorder %s12, 1
    %p50 = por %p48, %p49
    %p51 = scmp.ne.s32.totalorder %s43, %s46
    %p52 = scmp.eq.s32.totalorder %s12, 0
    %p53 = por %p51, %p52
    %p54 = scmp.ne.s32.totalorder %s43, %s46
    %p55 = scmp.eq.s32.totalorder %s17, 1
    %p56 = por %p54, %p55
    %p57 = scmp.ne.s32.totalorder %s46, %s47
    %p58 = scmp.eq.s32.totalorder %s17, 0
    %p59 = por %p57, %p58
    %p60 = scmp.ne.s32.totalorder %s46, %s47
    %p61 = scmp.eq.s32.totalorder %s18, 1
    %p62 = por %p60, %p61
    %p64 = scmp.ne.s32.totalorder %s47, %s63
    %p65 = scmp.eq.s32.totalorder %s18, 0
    %p66 = por %p64, %p65
    %s67 = ssub.s32 %s19, %s38
    %s68 = ssub.s32 %s20, %s34
    %s69 = sor.u32 %s67, %s68
    %p70 = scmp.eq.s32.totalorder %s69, 0
    %s72 = sadd.s32 %s71, 1
    %s73 = scalar_select %p70, %s71, %s72
    %p76 = pneg %p70
    %p77 = scmp.eq.s32.totalorder %s12, 1
    %p78 = por %p76, %p77
    %p79 = scmp.ne.s32.totalorder %s71, %s74
    %p80 = scmp.eq.s32.totalorder %s12, 0
    %p81 = por %p79, %p80
    %p82 = scmp.ne.s32.totalorder %s71, %s74
    %p83 = scmp.eq.s32.totalorder %s17, 1
    %p84 = por %p82, %p83
    %p85 = scmp.ne.s32.totalorder %s74, %s75
    %p86 = scmp.eq.s32.totalorder %s17, 0
    %p87 = por %p85, %p86
    %p88 = scmp.ne.s32.totalorder %s74, %s75
    %p89 = scmp.eq.s32.totalorder %s18, 1
    %p90 = por %p88, %p89
    %p92 = scmp.ne.s32.totalorder %s75, %s91
    %p93 = scmp.eq.s32.totalorder %s18, 0
    %p94 = por %p92, %p93
    %s96 = sadd.s32 %s95, 1
    %p99 = scmp.eq.s32.totalorder %s12, 1
    %p100 = scmp.ne.s32.totalorder %s95, %s97
    %p101 = scmp.eq.s32.totalorder %s12, 0
    %p102 = por %p100, %p101
    %p103 = scmp.ne.s32.totalorder %s95, %s97
    %p104 = scmp.eq.s32.totalorder %s17, 1
    %p105 = por %p103, %p104
    %p106 = scmp.ne.s32.totalorder %s97, %s98
    %p107 = scmp.eq.s32.totalorder %s17, 0
    %p108 = por %p106, %p107
    %p109 = scmp.ne.s32.totalorder %s97, %s98
    %p110 = scmp.eq.s32.totalorder %s18, 1
    %p111 = por %p109, %p110
    %p113 = scmp.ne.s32.totalorder %s98, %s112
    %p114 = scmp.eq.s32.totalorder %s18, 0
    %p115 = por %p113, %p114
    %s117 = sadd.s32 %s116, 1
    %p120 = scmp.eq.s32.totalorder %s12, 1
    %p121 = scmp.ne.s32.totalorder %s116, %s118
    %p122 = scmp.eq.s32.totalorder %s12, 0
    %p123 = por %p121, %p122
    %p124 = scmp.ne.s32.totalorder %s116, %s118
    %p125 = scmp.eq.s32.totalorder %s17, 1
    %p126 = por %p124, %p125
    %p127 = scmp.ne.s32.totalorder %s118, %s119
    %p128 = scmp.eq.s32.totalorder %s17, 0
    %p129 = por %p127, %p128
    %p130 = scmp.ne.s32.totalorder %s118, %s119
    %p131 = scmp.eq.s32.totalorder %s18, 1
    %p132 = por %p130, %p131
    %p134 = scmp.ne.s32.totalorder %s119, %s133
    %p135 = scmp.eq.s32.totalorder %s18, 0
    %p136 = por %p134, %p135
    %s138 = sadd.s32 %s137, 1
    %p141 = scmp.eq.s32.totalorder %s12, 1
    %p142 = scmp.ne.s32.totalorder %s137, %s139
    %p143 = scmp.eq.s32.totalorder %s12, 0
    %p144 = por %p142, %p143
    %p145 = scmp.ne.s32.totalorder %s137, %s139
    %p146 = scmp.eq.s32.totalorder %s17, 1
    %p147 = por %p145, %p146
    %p148 = scmp.ne.s32.totalorder %s139, %s140
    %p149 = scmp.eq.s32.totalorder %s17, 0
    %p150 = por %p148, %p149
    %p151 = scmp.ne.s32.totalorder %s139, %s140
    %p152 = scmp.eq.s32.totalorder %s18, 1
    %p153 = por %p151, %p152
    %p155 = scmp.ne.s32.totalorder %s140, %s154
    %p156 = scmp.eq.s32.totalorder %s18, 0
    %p157 = por %p155, %p156
    %s158 = ssub.s32 %s19, %s38
    %s159 = ssub.s32 %s20, %s34
    %s160 = sor.u32 %s158, %s159
    %p161 = scmp.eq.s32.totalorder %s160, 0
    %s163 = sadd.s32 %s162, 1
    %s164 = scalar_select %p161, %s162, %s163
    %p167 = pneg %p161
    %p168 = scmp.eq.s32.totalorder %s12, 1
    %p169 = por %p167, %p168
    %p170 = scmp.ne.s32.totalorder %s162, %s165
    %p171 = scmp.eq.s32.totalorder %s12, 0
    %p172 = por %p170, %p171
    %p173 = scmp.ne.s32.totalorder %s162, %s165
    %p174 = scmp.eq.s32.totalorder %s17, 1
    %p175 = por %p173, %p174
    %p176 = scmp.ne.s32.totalorder %s165, %s166
    %p177 = scmp.eq.s32.totalorder %s17, 0
    %p178 = por %p176, %p177
    %p179 = scmp.ne.s32.totalorder %s165, %s166
    %p180 = scmp.eq.s32.totalorder %s18, 1
    %p181 = por %p179, %p180
    %p183 = scmp.ne.s32.totalorder %s166, %s182
    %p184 = scmp.eq.s32.totalorder %s18, 0
    %p185 = por %p183, %p184
    %p186 = scmp.le.s32.totalorder 1, %s12
    %p187 = scmp.lt.s32.totalorder %s12, 3
    %p188 = pnand %p186, %p187
    %p189 = pneg %p188
    // Predicated region
    $region9: #{self_attention_pallas.1} parent=5 // pred_check
      _
    $region10: #{self_attention_pallas.1} parent=5 // pred_check_branch
      %191 = sbr.rel (%p188) target = $region12
    $region11: #{self_attention_pallas.1} parent=5 // pred_region
      %s192 = ssub.s32 %s12, 1
      // Predicated region
      $region13: #{self_attention_pallas.1} parent=11 // pred_check
        %p193 = pneg %p108
      $region14: #{self_attention_pallas.1} parent=11 // pred_check_branch
        %195 = sbr.rel (%p193) target = $region16
      $region15: #{self_attention_pallas.1} parent=11 // pred_region
        _
      $region16: #{self_attention_pallas.1} parent=11 // pred_fallthru
        _
      // Predicated region
      $region17: #{self_attention_pallas.1} parent=11 // pred_check
        %p196 = pneg %p129
      $region18: #{self_attention_pallas.1} parent=11 // pred_check_branch
        %198 = sbr.rel (%p196) target = $region20
      $region19: #{self_attention_pallas.1} parent=11 // pred_region
        _
      $region20: #{self_attention_pallas.1} parent=11 // pred_fallthru
        _
      // Predicated region
      $region21: #{self_attention_pallas.1} parent=11 // pred_check
        %p199 = pneg %p150
      $region22: #{self_attention_pallas.1} parent=11 // pred_check_branch
        %201 = sbr.rel (%p199) target = $region24
      $region23: #{self_attention_pallas.1} parent=11 // pred_region
        _
      $region24: #{self_attention_pallas.1} parent=11 // pred_fallthru
        _
    $region12: #{self_attention_pallas.1} parent=5 // pred_fallthru
      _
    %p202 = scmp.lt.s32.totalorder %s12, 2
    // Predicated region
    $region25: #{self_attention_pallas.1} parent=5 // pred_check
      %p203 = pneg %p202
    $region26: #{self_attention_pallas.1} parent=5 // pred_check_branch
      %205 = sbr.rel (%p203) target = $region28
    $region27: #{self_attention_pallas.1} parent=5 // pred_region
      // Predicated region
      $region29: #{self_attention_pallas.1} parent=27 // pred_check
        %p206 = pneg %p53
      $region30: #{self_attention_pallas.1} parent=27 // pred_check_branch
        %208 = sbr.rel (%p206) target = $region32
      $region31: #{self_attention_pallas.1} parent=27 // pred_region
        %p209 = scmp.lt.s32.totalorder %s19, 1
        %s210 = scalar_select %p209, %s19, 1
        %p211 = scmp.lt.s32.totalorder %s21, 0
        %s212 = scalar_select %p211, %s21, 0
        %s213 = smul.addr %s210, 5
        %s214 = sadd.s32 %s212, %s213
        %s215 = smul.addr %s214, 8
        %s216 = scalar_lea.vmem %s0, %s215
      $region32: #{self_attention_pallas.1} parent=27 // pred_fallthru
        _
      // Predicated region
      $region33: #{self_attention_pallas.1} parent=27 // pred_check
        %p217 = pneg %p81
      $region34: #{self_attention_pallas.1} parent=27 // pred_check_branch
        %219 = sbr.rel (%p217) target = $region36
      $region35: #{self_attention_pallas.1} parent=27 // pred_region
        %p220 = scmp.lt.s32.totalorder %s19, 1
        %s221 = scalar_select %p220, %s19, 1
        %p222 = scmp.lt.s32.totalorder %s20, 0
        %s223 = scalar_select %p222, %s20, 0
        %s224 = smul.addr %s221, 5
        %s225 = sadd.s32 %s223, %s224
        %s226 = smul.addr %s225, 8
        %s227 = scalar_lea.vmem %s1, %s226
      $region36: #{self_attention_pallas.1} parent=27 // pred_fallthru
        _
    $region28: #{self_attention_pallas.1} parent=5 // pred_fallthru
      _
    %p228 = scmp.le.s32.totalorder 1, %s12
    %p229 = scmp.lt.s32.totalorder %s12, 3
    %p230 = pnand %p228, %p229
    %p231 = pneg %p230
    // Predicated region
    $region37: #{self_attention_pallas.1} parent=5 // pred_check
      _
    $region38: #{self_attention_pallas.1} parent=5 // pred_check_branch
      %233 = sbr.rel (%p230) target = $region40
    $region39: #{self_attention_pallas.1} parent=5 // pred_region
      %s234 = ssub.s32 %s12, 1
      %p235 = scmp.lt.s32.totalorder %s22, 1
      %s236 = scalar_select %p235, %s22, 1
      %p237 = scmp.lt.s32.totalorder %s24, 0
      %s238 = scalar_select %p237, %s24, 0
      %s239 = smul.addr %s236, 5
      %s240 = sadd.s32 %s238, %s239
      %s241 = smul.addr %s240, 8
      %s242 = scalar_lea.vmem %s0, %s241
      %p243 = pneg %p59
      %p244 = pneg %p56
      %p245 = scmp.lt.s32.totalorder %s22, 1
      %s246 = scalar_select %p245, %s22, 1
      %p247 = scmp.lt.s32.totalorder %s23, 0
      %s248 = scalar_select %p247, %s23, 0
      %s249 = smul.addr %s246, 5
      %s250 = sadd.s32 %s248, %s249
      %s251 = smul.addr %s250, 8
      %s252 = scalar_lea.vmem %s1, %s251
      %p253 = pneg %p87
      %p254 = pneg %p84
      %p255 = pneg %p108
      %p256 = pneg %p105
      %p257 = pneg %p129
      %p258 = pneg %p126
      %p259 = pneg %p150
      %p260 = pneg %p147
      %p261 = pneg %p178
      %p262 = pneg %p175
      %p263 = scmp.lt.s32.totalorder %s22, 1
      %s264 = scalar_select %p263, %s22, 1
      %p265 = scmp.lt.s32.totalorder %s23, 0
      %s266 = scalar_select %p265, %s23, 0
      %s267 = smul.addr %s264, 4
      %s268 = sadd.s32 %s266, %s267
      %s269 = smul.addr %s268, 8
      %s270 = scalar_lea.vmem %s5, %s269
      %p271 = scmp.lt.s32.totalorder %s22, 1
      %s272 = scalar_select %p271, %s22, 1
      %p273 = scmp.lt.s32.totalorder %s24, 0
      %s274 = scalar_select %p273, %s24, 0
      %s275 = smul.addr %s272, 5
      %s276 = sadd.s32 %s274, %s275
      %s277 = smul.addr %s276, 8
      %s278 = scalar_lea.vmem %s0, %s277
      %p279 = scmp.lt.s32.totalorder %s22, 1
      %s280 = scalar_select %p279, %s22, 1
      %p281 = scmp.lt.s32.totalorder %s23, 0
      %s282 = scalar_select %p281, %s23, 0
      %s283 = smul.addr %s280, 5
      %s284 = sadd.s32 %s282, %s283
      %s285 = smul.addr %s284, 8
      %s286 = scalar_lea.vmem %s1, %s285
      %p287 = scmp.lt.s32.totalorder %s22, 1
      %s288 = scalar_select %p287, %s22, 1
      %p289 = scmp.lt.s32.totalorder %s23, 0
      %s290 = scalar_select %p289, %s23, 0
      %s291 = smul.addr %s288, 4
      %s292 = sadd.s32 %s290, %s291
      %s293 = smul.addr %s292, 8
      %s294 = scalar_lea.vmem %s5, %s293
      %p296 = scmp.eq.s32.totalorder %s24, 0
      // Predicated region
      $region41: #{self_attention_pallas.1} parent=39 // pred_check
        %p297 = pneg %p296
      $region42: #{self_attention_pallas.1} parent=39 // pred_check_branch
        %299 = sbr.rel (%p297) target = $region44
      $region43: #{self_attention_pallas.1} parent=39 // pred_region
        %300 = vst [vmem:[#allocation3] sm:$0x1] -inf
        %301 = vst [vmem:[#allocation4] sm:$0x1] 0.0
        %302 = vst [vmem:[#allocation5] sm:$0xff] 0.0
        %303 = vst [vmem:[#allocation5 + $0x8] sm:$0xff] 0.0
        %304 = vst [vmem:[#allocation5 + $0x10] sm:$0xff] 0.0
        %305 = vst [vmem:[#allocation5 + $0x18] sm:$0xff] 0.0
        %v306 = vld [vmem:[%s3] sm:$0xff]
        %v307 = vld [vmem:[%s286] sm:$0xff]
        %v308 = vld [vmem:[%s286 + $0x8] sm:$0xff]
        %v309 = vld [vmem:[%s286 + $0x10] sm:$0xff]
        %v310 = vld [vmem:[%s286 + $0x18] sm:$0xff]
        %v311 = vld [vmem:[%s286 + $0x20] sm:$0x1]
        %vm312 = vcmask 269312
        %v314 = vsel %vm312, %v306, 0
        %vm316 = vcmask 1040384
        %v318 = vsel %vm316, %v311, 0
        %320 = vmatprep.subr.mxu0 0.0
        %321 = vmatpush1.msra.mxu0 %v307
        %322 = vmatprep.subr.mxu0 0.0
        %323 = vmatpush1.msra.mxu0 %v308
        %324 = vmatprep.subr.mxu0 0.0
        %325 = vmatpush1.msra.mxu0 %v309
        %326 = vmatprep.subr.mxu0 0.0
        %327 = vmatpush1.msra.mxu0 %v310
        %328 = vmatprep.subr.mxu0 0.0
        %329 = vmatpush1.msra.mxu0 %v318
        %330 = vmatprep.subr.mxu0 0.0
        %331 = vmatpush1.msra.mxu0 0.0
        %332 = vmatprep.subr.mxu0 0.0
        %333 = vmatpush1.msra.mxu0 0.0
        %334 = vmatprep.subr.mxu0 0.0
        %335 = vmatpush1.msra.mxu0 0.0
        %336 = vmatprep.subr.mxu0 0.0
        %337 = vmatpush1.msra.mxu0 0.0
        %338 = vmatprep.subr.mxu0 0.0
        %339 = vmatpush1.msra.mxu0 0.0
        %340 = vmatprep.subr.mxu0 0.0
        %341 = vmatpush1.msra.mxu0 0.0
        %342 = vmatprep.subr.mxu0 0.0
        %343 = vmatpush1.msra.mxu0 0.0
        %344 = vmatprep.subr.mxu0 0.0
        %345 = vmatpush1.msra.mxu0 0.0
        %346 = vmatprep.subr.mxu0 0.0
        %347 = vmatpush1.msra.mxu0 0.0
        %348 = vmatprep.subr.mxu0 0.0
        %349 = vmatpush1.msra.mxu0 0.0
        %350 = vmatprep.subr.mxu0 0.0
        %351 = vmatpush1.msra.mxu0 0.0
        %352 = vmatprep.subr.mxu0 0.0
        %353 = vmatpush1.msra.mxu0 0.0
        %354 = vmatprep.subr.mxu0 0.0
        %355 = vmatpush1.msra.mxu0 0.0
        %356 = vmatprep.subr.mxu0 0.0
        %357 = vmatpush1.msra.mxu0 0.0
        %358 = vmatprep.subr.mxu0 0.0
        %359 = vmatpush1.msra.mxu0 0.0
        %360 = vmatprep.subr.mxu0 0.0
        %361 = vmatpush1.msra.mxu0 0.0
        %362 = vmatprep.subr.mxu0 0.0
        %363 = vmatpush1.msra.mxu0 0.0
        %364 = vmatprep.subr.mxu0 0.0
        %365 = vmatpush1.msra.mxu0 0.0
        %366 = vmatprep.subr.mxu0 0.0
        %367 = vmatpush1.msra.mxu0 0.0
        %368 = vmatprep.subr.mxu0 0.0
        %369 = vmatpush1.msra.mxu0 0.0
        %370 = vmatprep.subr.mxu0 0.0
        %371 = vmatpush1.msra.mxu0 0.0
        %372 = vmatprep.subr.mxu0 0.0
        %373 = vmatpush1.msra.mxu0 0.0
        %374 = vmatprep.subr.mxu0 0.0
        %375 = vmatpush1.msra.mxu0 0.0
        %376 = vmatprep.subr.mxu0 0.0
        %377 = vmatpush1.msra.mxu0 0.0
        %378 = vmatprep.subr.mxu0 0.0
        %379 = vmatpush1.msra.mxu0 0.0
        %380 = vmatprep.subr.mxu0 0.0
        %381 = vmatpush1.msra.mxu0 0.0
        %382 = vmatprep.subr.mxu0 0.0
        %383 = vmatpush1.msra.mxu0 0.0
        %384 = vmatprep.mubr.f32.mxu0 0.0
        %385 = vmatmul.mubr.f32.gmra.mrb[0].mxu0 %v314
        %v386 = vpop.f32.mrb[0].mxu0
        %v387 = vadd.f32 0.0, %v386
        %v388 = vpop.f32.mrb[0].mxu0
        %389 = vdwg.mxu0
        %v390 = vpack.c.bf16 %v387, %v387
        %391 = vst [vmem:[#allocation2] sm:$0xf] %v390
      $region44: #{self_attention_pallas.1} parent=39 // pred_fallthru
        _
      %v392 = vld [vmem:[%s2] sm:$0xff]
      %v393 = vld [vmem:[%s2 + $0x8] sm:$0xff]
      %v394 = vld [vmem:[%s2 + $0x10] sm:$0xff]
      %v395 = vld [vmem:[%s2 + $0x18] sm:$0xff]
      %v396 = vld [vmem:[%s2 + $0x20] sm:$0xff]
      %v397 = vld [vmem:[%s278] sm:$0xff]
      %v398 = vld [vmem:[%s278 + $0x8] sm:$0xff]
      %v399 = vld [vmem:[%s278 + $0x10] sm:$0xff]
      %v400 = vld [vmem:[%s278 + $0x18] sm:$0xff]
      %v401 = vld [vmem:[%s278 + $0x20] sm:$0x1]
      %vm402 = vcmask 269312
      %v404 = vsel %vm402, %v392, 0
      %v407 = vsel %vm402, %v393, 0
      %v410 = vsel %vm402, %v394, 0
      %v413 = vsel %vm402, %v395, 0
      %v416 = vsel %vm402, %v396, 0
      %vm418 = vcmask 1040384
      %v420 = vsel %vm418, %v401, 0
      %422 = vmatprep.subr.mxu0 0.0
      %423 = vmatpush1.msra.mxu0 %v397
      %424 = vmatprep.subr.mxu0 0.0
      %425 = vmatpush1.msra.mxu0 %v398
      %426 = vmatprep.subr.mxu0 0.0
      %427 = vmatpush1.msra.mxu0 %v399
      %428 = vmatprep.subr.mxu0 0.0
      %429 = vmatpush1.msra.mxu0 %v400
      %430 = vmatprep.subr.mxu0 0.0
      %431 = vmatpush1.msra.mxu0 %v420
      %432 = vmatprep.subr.mxu0 0.0
      %433 = vmatpush1.msra.mxu0 0.0
      %434 = vmatprep.subr.mxu0 0.0
      %435 = vmatpush1.msra.mxu0 0.0
      %436 = vmatprep.subr.mxu0 0.0
      %437 = vmatpush1.msra.mxu0 0.0
      %438 = vmatprep.subr.mxu0 0.0
      %439 = vmatpush1.msra.mxu0 0.0
      %440 = vmatprep.subr.mxu0 0.0
      %441 = vmatpush1.msra.mxu0 0.0
      %442 = vmatprep.subr.mxu0 0.0
      %443 = vmatpush1.msra.mxu0 0.0
      %444 = vmatprep.subr.mxu0 0.0
      %445 = vmatpush1.msra.mxu0 0.0
      %446 = vmatprep.subr.mxu0 0.0
      %447 = vmatpush1.msra.mxu0 0.0
      %448 = vmatprep.subr.mxu0 0.0
      %449 = vmatpush1.msra.mxu0 0.0
      %450 = vmatprep.subr.mxu0 0.0
      %451 = vmatpush1.msra.mxu0 0.0
      %452 = vmatprep.subr.mxu0 0.0
      %453 = vmatpush1.msra.mxu0 0.0
      %454 = vmatprep.subr.mxu0 0.0
      %455 = vmatpush1.msra.mxu0 0.0
      %456 = vmatprep.subr.mxu0 0.0
      %457 = vmatpush1.msra.mxu0 0.0
      %458 = vmatprep.subr.mxu0 0.0
      %459 = vmatpush1.msra.mxu0 0.0
      %460 = vmatprep.subr.mxu0 0.0
      %461 = vmatpush1.msra.mxu0 0.0
      %462 = vmatprep.subr.mxu0 0.0
      %463 = vmatpush1.msra.mxu0 0.0
      %464 = vmatprep.subr.mxu0 0.0
      %465 = vmatpush1.msra.mxu0 0.0
      %466 = vmatprep.subr.mxu0 0.0
      %467 = vmatpush1.msra.mxu0 0.0
      %468 = vmatprep.subr.mxu0 0.0
      %469 = vmatpush1.msra.mxu0 0.0
      %470 = vmatprep.subr.mxu0 0.0
      %471 = vmatpush1.msra.mxu0 0.0
      %472 = vmatprep.subr.mxu0 0.0
      %473 = vmatpush1.msra.mxu0 0.0
      %474 = vmatprep.subr.mxu0 0.0
      %475 = vmatpush1.msra.mxu0 0.0
      %476 = vmatprep.subr.mxu0 0.0
      %477 = vmatpush1.msra.mxu0 0.0
      %478 = vmatprep.subr.mxu0 0.0
      %479 = vmatpush1.msra.mxu0 0.0
      %480 = vmatprep.subr.mxu0 0.0
      %481 = vmatpush1.msra.mxu0 0.0
      %482 = vmatprep.subr.mxu0 0.0
      %483 = vmatpush1.msra.mxu0 0.0
      %484 = vmatprep.subr.mxu0 0.0
      %485 = vmatpush1.msra.mxu0 0.0
      %486 = vmatprep.mubr.f32.mxu0 0.0
      %487 = vmatmul.mubr.f32.gmra.mrb[0].mxu0 %v404
      %v488 = vpop.f32.mrb[0].mxu0
      %v489 = vadd.f32 0.0, %v488
      %v490 = vpop.f32.mrb[0].mxu0
      %491 = vmatprep.mubr.f32.mxu0 0.0
      %492 = vmatmul.mubr.f32.gmra.mrb[0].mxu0 %v407
      %v493 = vpop.f32.mrb[0].mxu0
      %v494 = vadd.f32 0.0, %v493
      %v495 = vpop.f32.mrb[0].mxu0
      %496 = vmatprep.mubr.f32.mxu0 0.0
      %497 = vmatmul.mubr.f32.gmra.mrb[0].mxu0 %v410
      %v498 = vpop.f32.mrb[0].mxu0
      %v499 = vadd.f32 0.0, %v498
      %v500 = vpop.f32.mrb[0].mxu0
      %501 = vmatprep.mubr.f32.mxu0 0.0
      %502 = vmatmul.mubr.f32.gmra.mrb[0].mxu0 %v413
      %v503 = vpop.f32.mrb[0].mxu0
      %v504 = vadd.f32 0.0, %v503
      %v505 = vpop.f32.mrb[0].mxu0
      %506 = vmatprep.mubr.f32.mxu0 0.0
      %507 = vmatmul.mubr.f32.gmra.mrb[0].mxu0 %v416
      %v508 = vpop.f32.mrb[0].mxu0
      %v509 = vadd.f32 0.0, %v508
      %v510 = vpop.f32.mrb[0].mxu0
      %511 = vdwg.mxu0
      %v512 = vpack.c.bf16 %v489, %v489
      %v513 = vpack.c.bf16 %v499, %v494
      %v514 = vpack.c.bf16 %v509, %v504
      %v515 = vld [vmem:[#allocation2] sm:$0xf]
      %516 = vxpose.xlu0.c.b16.start [1/8] %v512, 128
      %517 = vxpose.xlu0.c.b16.cont [2/8] 0, 128
      %518 = vxpose.xlu0.c.b16.cont [3/8] 0, 128
      %519 = vxpose.xlu0.c.b16.cont [4/8] 0, 128
      %520 = vxpose.xlu0.c.b16.cont [5/8] 0, 128
      %521 = vxpose.xlu0.c.b16.cont [6/8] 0, 128
      %522 = vxpose.xlu0.c.b16.cont [7/8] 0, 128
      %523 = vxpose.xlu0.c.b16.end [8/8] 0, 128
      %v524 = vpop.trf.xlu0
      %v525 = vpop.trf.xlu0
      %v526 = vpop.trf.xlu0
      %v527 = vpop.trf.xlu0
      %v528 = vpop.trf.xlu0
      %v529 = vpop.trf.xlu0
      %v530 = vpop.trf.xlu0
      %v531 = vpop.trf.xlu0
      %vm532 = vcmask 64512
      %v534 = vsel %vm532, %v524, 0
      %v537 = vsel %vm532, %v525, 0
      %v540 = vsel %vm532, %v526, 0
      %v543 = vsel %vm532, %v527, 0
      %v546 = vsel %vm532, %v528, 0
      %v549 = vsel %vm532, %v529, 0
      %v552 = vsel %vm532, %v530, 0
      %v555 = vsel %vm532, %v531, 0
      %vm557 = vcmask 1043456
      %v559 = vsel %vm557, %v515, 0
      %561 = vmatprep.subr.bf16.mxu0 0
      %562 = vmatpush1.bf16.msra.mxu0 %v559
      %563 = vmatprep.subr.bf16.mxu0 0
      %564 = vmatpush1.bf16.msra.mxu0 0
      %565 = vmatprep.subr.bf16.mxu0 0
      %566 = vmatpush1.bf16.msra.mxu0 0
      %567 = vmatprep.subr.bf16.mxu0 0
      %568 = vmatpush1.bf16.msra.mxu0 0
      %569 = vmatprep.subr.bf16.mxu0 0
      %570 = vmatpush1.bf16.msra.mxu0 0
      %571 = vmatprep.subr.bf16.mxu0 0
      %572 = vmatpush1.bf16.msra.mxu0 0
      %573 = vmatprep.subr.bf16.mxu0 0
      %574 = vmatpush1.bf16.msra.mxu0 0
      %575 = vmatprep.subr.bf16.mxu0 0
      %576 = vmatpush1.bf16.msra.mxu0 0
      %577 = vmatprep.subr.bf16.mxu0 0
      %578 = vmatpush1.bf16.msra.mxu0 0
      %579 = vmatprep.subr.bf16.mxu0 0
      %580 = vmatpush1.bf16.msra.mxu0 0
      %581 = vmatprep.subr.bf16.mxu0 0
      %582 = vmatpush1.bf16.msra.mxu0 0
      %583 = vmatprep.subr.bf16.mxu0 0
      %584 = vmatpush1.bf16.msra.mxu0 0
      %585 = vmatprep.subr.bf16.mxu0 0
      %586 = vmatpush1.bf16.msra.mxu0 0
      %587 = vmatprep.subr.bf16.mxu0 0
      %588 = vmatpush1.bf16.msra.mxu0 0
      %589 = vmatprep.subr.bf16.mxu0 0
      %590 = vmatpush1.bf16.msra.mxu0 0
      %591 = vmatprep.subr.bf16.mxu0 0
      %592 = vmatpush1.bf16.msra.mxu0 0
      %593 = vmatprep.mubr.bf16.mxu0 0
      %594 = vmatmul.mubr.bf16.gmra.mrb[0].mxu0 %v534
      %v595 = vpop.f32.mrb[0].mxu0
      %v596 = vadd.f32 0.0, %v595
      %v597 = vpop.f32.mrb[0].mxu0
      %v598 = vpop.f32.mrb[0].mxu0
      %v599 = vadd.f32 0.0, %v598
      %v600 = vpop.f32.mrb[0].mxu0
      %601 = vmatprep.mubr.bf16.mxu0 0
      %602 = vmatmul.mubr.bf16.gmra.mrb[0].mxu0 %v537
      %v603 = vpop.f32.mrb[0].mxu0
      %v604 = vadd.f32 0.0, %v603
      %v605 = vpop.f32.mrb[0].mxu0
      %v606 = vpop.f32.mrb[0].mxu0
      %v607 = vadd.f32 0.0, %v606
      %v608 = vpop.f32.mrb[0].mxu0
      %609 = vmatprep.mubr.bf16.mxu0 0
      %610 = vmatmul.mubr.bf16.gmra.mrb[0].mxu0 %v540
      %v611 = vpop.f32.mrb[0].mxu0
      %v612 = vadd.f32 0.0, %v611
      %v613 = vpop.f32.mrb[0].mxu0
      %v614 = vpop.f32.mrb[0].mxu0
      %v615 = vadd.f32 0.0, %v614
      %v616 = vpop.f32.mrb[0].mxu0
      %617 = vmatprep.mubr.bf16.mxu0 0
      %618 = vmatmul.mubr.bf16.gmra.mrb[0].mxu0 %v543
      %v619 = vpop.f32.mrb[0].mxu0
      %v620 = vadd.f32 0.0, %v619
      %v621 = vpop.f32.mrb[0].mxu0
      %v622 = vpop.f32.mrb[0].mxu0
      %v623 = vadd.f32 0.0, %v622
      %v624 = vpop.f32.mrb[0].mxu0
      %625 = vmatprep.mubr.bf16.mxu0 0
      %626 = vmatmul.mubr.bf16.gmra.mrb[0].mxu0 %v546
      %v627 = vpop.f32.mrb[0].mxu0
      %v628 = vadd.f32 0.0, %v627
      %v629 = vpop.f32.mrb[0].mxu0
      %v630 = vpop.f32.mrb[0].mxu0
      %v631 = vadd.f32 0.0, %v630
      %v632 = vpop.f32.mrb[0].mxu0
      %633 = vmatprep.mubr.bf16.mxu0 0
      %634 = vmatmul.mubr.bf16.gmra.mrb[0].mxu0 %v549
      %v635 = vpop.f32.mrb[0].mxu0
      %v636 = vadd.f32 0.0, %v635
      %v637 = vpop.f32.mrb[0].mxu0
      %v638 = vpop.f32.mrb[0].mxu0
      %v639 = vadd.f32 0.0, %v638
      %v640 = vpop.f32.mrb[0].mxu0
      %641 = vmatprep.mubr.bf16.mxu0 0
      %642 = vmatmul.mubr.bf16.gmra.mrb[0].mxu0 %v552
      %v643 = vpop.f32.mrb[0].mxu0
      %v644 = vadd.f32 0.0, %v643
      %v645 = vpop.f32.mrb[0].mxu0
      %v646 = vpop.f32.mrb[0].mxu0
      %v647 = vadd.f32 0.0, %v646
      %v648 = vpop.f32.mrb[0].mxu0
      %649 = vmatprep.mubr.bf16.mxu0 0
      %650 = vmatmul.mubr.bf16.gmra.mrb[0].mxu0 %v555
      %v651 = vpop.f32.mrb[0].mxu0
      %v652 = vadd.f32 0.0, %v651
      %v653 = vpop.f32.mrb[0].mxu0
      %v654 = vpop.f32.mrb[0].mxu0
      %v655 = vadd.f32 0.0, %v654
      %v656 = vpop.f32.mrb[0].mxu0
      %657 = vdwg.mxu0
      %s658 = smul.u32 %s24, 128
      %v659 = vlaneseq
      %v660 = vshrl.u32 %v659, 7
      %v661 = vadd.s32 %v660, 8
      %v662 = vadd.s32 %v660, 16
      %v663 = vadd.s32 %v660, 24
      %v664 = vadd.s32 %v660, 32
      %v665 = vadd.s32 %v660, 40
      %v666 = vadd.s32 %v660, 48
      %v667 = vadd.s32 %v660, 56
      %v668 = vadd.s32 %v660, 64
      %v669 = vadd.s32 %v660, 72
      %v670 = vadd.s32 %v660, 80
      %v671 = vadd.s32 %v660, 88
      %v672 = vadd.s32 %v660, 96
      %v673 = vadd.s32 %v660, 104
      %v674 = vadd.s32 %v660, 112
      %v675 = vadd.s32 %v660, 120
      %v676 = vstv %s658
      %v677 = vadd.s32 %v676, %v660
      %v678 = vadd.s32 %v676, %v661
      %v679 = vadd.s32 %v676, %v662
      %v680 = vadd.s32 %v676, %v663
      %v681 = vadd.s32 %v676, %v664
      %v682 = vadd.s32 %v676, %v665
      %v683 = vadd.s32 %v676, %v666
      %v684 = vadd.s32 %v676, %v667
      %v685 = vadd.s32 %v676, %v668
      %v686 = vadd.s32 %v676, %v669
      %v687 = vadd.s32 %v676, %v670
      %v688 = vadd.s32 %v676, %v671
      %v689 = vadd.s32 %v676, %v672
      %v690 = vadd.s32 %v676, %v673
      %v691 = vadd.s32 %v676, %v674
      %v692 = vadd.s32 %v676, %v675
      %vm693 = vcmp.lt.s32.totalorder %v677, 64
      %vm694 = vcmp.lt.s32.totalorder %v678, 64
      %vm695 = vcmp.lt.s32.totalorder %v679, 64
      %vm696 = vcmp.lt.s32.totalorder %v680, 64
      %vm697 = vcmp.lt.s32.totalorder %v681, 64
      %vm698 = vcmp.lt.s32.totalorder %v682, 64
      %vm699 = vcmp.lt.s32.totalorder %v683, 64
      %vm700 = vcmp.lt.s32.totalorder %v684, 64
      %vm701 = vcmp.lt.s32.totalorder %v685, 64
      %vm702 = vcmp.lt.s32.totalorder %v686, 64
      %vm703 = vcmp.lt.s32.totalorder %v687, 64
      %vm704 = vcmp.lt.s32.totalorder %v688, 64
      %vm705 = vcmp.lt.s32.totalorder %v689, 64
      %vm706 = vcmp.lt.s32.totalorder %v690, 64
      %vm707 = vcmp.lt.s32.totalorder %v691, 64
      %vm708 = vcmp.lt.s32.totalorder %v692, 64
      %v709 = vsel %vm693, 1, 0
      %v710 = vsel %vm694, 1, 0
      %v711 = vsel %vm695, 1, 0
      %v712 = vsel %vm696, 1, 0
      %v713 = vsel %vm697, 1, 0
      %v714 = vsel %vm698, 1, 0
      %v715 = vsel %vm699, 1, 0
      %v716 = vsel %vm700, 1, 0
      %v717 = vsel %vm701, 1, 0
      %v718 = vsel %vm702, 1, 0
      %v719 = vsel %vm703, 1, 0
      %v720 = vsel %vm704, 1, 0
      %v721 = vsel %vm705, 1, 0
      %v722 = vsel %vm706, 1, 0
      %v723 = vsel %vm707, 1, 0
      %v724 = vsel %vm708, 1, 0
      %vm725 = vcmp.eq.s32.totalorder %v709, 1
      %vm726 = vcmp.eq.s32.totalorder %v710, 1
      %vm727 = vcmp.eq.s32.totalorder %v711, 1
      %vm728 = vcmp.eq.s32.totalorder %v712, 1
      %vm729 = vcmp.eq.s32.totalorder %v713, 1
      %vm730 = vcmp.eq.s32.totalorder %v714, 1
      %vm731 = vcmp.eq.s32.totalorder %v715, 1
      %vm732 = vcmp.eq.s32.totalorder %v716, 1
      %vm733 = vcmp.eq.s32.totalorder %v717, 1
      %vm734 = vcmp.eq.s32.totalorder %v718, 1
      %vm735 = vcmp.eq.s32.totalorder %v719, 1
      %vm736 = vcmp.eq.s32.totalorder %v720, 1
      %vm737 = vcmp.eq.s32.totalorder %v721, 1
      %vm738 = vcmp.eq.s32.totalorder %v722, 1
      %vm739 = vcmp.eq.s32.totalorder %v723, 1
      %vm740 = vcmp.eq.s32.totalorder %v724, 1
      %v741 = vsel %vm725, %v596, -1e+30
      %v742 = vsel %vm726, %v599, -1e+30
      %v743 = vsel %vm727, %v604, -1e+30
      %v744 = vsel %vm728, %v607, -1e+30
      %v745 = vsel %vm729, %v612, -1e+30
      %v746 = vsel %vm730, %v615, -1e+30
      %v747 = vsel %vm731, %v620, -1e+30
      %v748 = vsel %vm732, %v623, -1e+30
      %v749 = vsel %vm733, %v628, -1e+30
      %v750 = vsel %vm734, %v631, -1e+30
      %v751 = vsel %vm735, %v636, -1e+30
      %v752 = vsel %vm736, %v639, -1e+30
      %v753 = vsel %vm737, %v644, -1e+30
      %v754 = vsel %vm738, %v647, -1e+30
      %v755 = vsel %vm739, %v652, -1e+30
      %v756 = vsel %vm740, %v655, -1e+30
      %v757 = vld [vmem:[#allocation3] sm:$0x1]
      %v758 = vmax.f32 %v741, %v745
      %v759 = vmax.f32 %v742, %v746
      %v760 = vmax.f32 %v743, %v747
      %v761 = vmax.f32 %v744, %v748
      %v762 = vmax.f32 %v758, %v749
      %v763 = vmax.f32 %v759, %v750
      %v764 = vmax.f32 %v760, %v751
      %v765 = vmax.f32 %v761, %v752
      %v766 = vmax.f32 %v762, %v753
      %v767 = vmax.f32 %v763, %v754
      %v768 = vmax.f32 %v764, %v755
      %v769 = vmax.f32 %v765, %v756
      %v770 = vmax.f32 %v766, %v767
      %v771 = vmax.f32 %v768, %v769
      %v772 = vmax.f32 %v770, %v771
      %v773 = vrot.slane %v772, 4
      %v774 = vmax.f32 %v772, %v773
      %v775 = vrot.slane %v774, 2
      %v776 = vmax.f32 %v774, %v775
      %v777 = vrot.slane %v776, 1
      %v778 = vmax.f32 %v776, %v777
      %v779 = vmax.f32 %v757, %v778
      %v780 = vsub.f32 %v757, %v779
      %v781 = vmul.f32 %v780, 1.442695
      %v782 = vpow.pop %v781
      %v784 = vlaneseq
      %v785 = vshrl.u32 %v784, 7
      %v786 = vsub.s32 0, %v785
      %v787 = vrot.slane %v779, %v786
      %v789 = vsub.f32 %v741, %v787
      %v790 = vsub.f32 %v742, %v787
      %v791 = vsub.f32 %v743, %v787
      %v792 = vsub.f32 %v744, %v787
      %v793 = vsub.f32 %v745, %v787
      %v794 = vsub.f32 %v746, %v787
      %v795 = vsub.f32 %v747, %v787
      %v796 = vsub.f32 %v748, %v787
      %v797 = vsub.f32 %v749, %v787
      %v798 = vsub.f32 %v750, %v787
      %v799 = vsub.f32 %v751, %v787
      %v800 = vsub.f32 %v752, %v787
      %v801 = vsub.f32 %v753, %v787
      %v802 = vsub.f32 %v754, %v787
      %v803 = vsub.f32 %v755, %v787
      %v804 = vsub.f32 %v756, %v787
      %v805 = vmul.f32 %v789, 1.442695
      %v806 = vpow.pop %v805
      %v807 = vmul.f32 %v790, 1.442695
      %v808 = vpow.pop %v807
      %v809 = vmul.f32 %v791, 1.442695
      %v810 = vpow.pop %v809
      %v811 = vmul.f32 %v792, 1.442695
      %v812 = vpow.pop %v811
      %v813 = vmul.f32 %v793, 1.442695
      %v814 = vpow.pop %v813
      %v815 = vmul.f32 %v794, 1.442695
      %v816 = vpow.pop %v815
      %v817 = vmul.f32 %v795, 1.442695
      %v818 = vpow.pop %v817
      %v819 = vmul.f32 %v796, 1.442695
      %v820 = vpow.pop %v819
      %v821 = vmul.f32 %v797, 1.442695
      %v822 = vpow.pop %v821
      %v823 = vmul.f32 %v798, 1.442695
      %v824 = vpow.pop %v823
      %v825 = vmul.f32 %v799, 1.442695
      %v826 = vpow.pop %v825
      %v827 = vmul.f32 %v800, 1.442695
      %v828 = vpow.pop %v827
      %v829 = vmul.f32 %v801, 1.442695
      %v830 = vpow.pop %v829
      %v831 = vmul.f32 %v802, 1.442695
      %v832 = vpow.pop %v831
      %v833 = vmul.f32 %v803, 1.442695
      %v834 = vpow.pop %v833
      %v835 = vmul.f32 %v804, 1.442695
      %v836 = vpow.pop %v835
      %v837 = vld [vmem:[#allocation4] sm:$0x1]
      %v838 = vmul.f32 %v782, %v837
      %v839 = vadd.f32 %v806, %v808
      %v840 = vadd.f32 %v839, %v810
      %v841 = vadd.f32 %v840, %v812
      %v842 = vadd.f32 %v841, %v814
      %v843 = vadd.f32 %v842, %v816
      %v844 = vadd.f32 %v843, %v818
      %v845 = vadd.f32 %v844, %v820
      %v846 = vadd.f32 %v845, %v822
      %v847 = vadd.f32 %v846, %v824
      %v848 = vadd.f32 %v847, %v826
      %v849 = vadd.f32 %v848, %v828
      %v850 = vadd.f32 %v849, %v830
      %v851 = vadd.f32 %v850, %v832
      %v852 = vadd.f32 %v851, %v834
      %v853 = vadd.f32 %v852, %v836
      %v854 = vrot.slane %v853, 4
      %v855 = vadd.f32 %v853, %v854
      %v856 = vrot.slane %v855, 2
      %v857 = vadd.f32 %v855, %v856
      %v858 = vrot.slane %v857, 1
      %v859 = vadd.f32 %v857, %v858
      %v860 = vadd.f32 %v838, %v859
      %861 = vst [vmem:[#allocation4] sm:$0x1] %v860
      %v862 = vld [vmem:[#allocation5] sm:$0xff]
      %v863 = vld [vmem:[#allocation5 + $0x8] sm:$0xff]
      %v864 = vld [vmem:[#allocation5 + $0x10] sm:$0xff]
      %v865 = vld [vmem:[#allocation5 + $0x18] sm:$0xff]
      %v867 = vlaneseq
      %v868 = vshrl.u32 %v867, 7
      %v869 = vsub.s32 0, %v868
      %v870 = vrot.slane %v782, %v869
      %v872 = vmul.f32 %v870, %v862
      %v873 = vmul.f32 %v870, %v863
      %v874 = vmul.f32 %v870, %v864
      %v875 = vmul.f32 %v870, %v865
      %v876 = vpack.c.bf16 %v808, %v806
      %v877 = vpack.c.bf16 %v812, %v810
      %v878 = vpack.c.bf16 %v816, %v814
      %v879 = vpack.c.bf16 %v820, %v818
      %v880 = vpack.c.bf16 %v824, %v822
      %v881 = vpack.c.bf16 %v828, %v826
      %v882 = vpack.c.bf16 %v832, %v830
      %v883 = vpack.c.bf16 %v836, %v834
      %884 = vmatprep.subr.bf16.mxu0 0
      %885 = vmatpush1.bf16.msra.mxu0 %v876
      %886 = vmatprep.subr.bf16.mxu0 0
      %887 = vmatpush1.bf16.msra.mxu0 %v877
      %888 = vmatprep.subr.bf16.mxu0 0
      %889 = vmatpush1.bf16.msra.mxu0 %v878
      %890 = vmatprep.subr.bf16.mxu0 0
      %891 = vmatpush1.bf16.msra.mxu0 %v879
      %892 = vmatprep.subr.bf16.mxu0 0
      %893 = vmatpush1.bf16.msra.mxu0 %v880
      %894 = vmatprep.subr.bf16.mxu0 0
      %895 = vmatpush1.bf16.msra.mxu0 %v881
      %896 = vmatprep.subr.bf16.mxu0 0
      %897 = vmatpush1.bf16.msra.mxu0 %v882
      %898 = vmatprep.subr.bf16.mxu0 0
      %899 = vmatpush1.bf16.msra.mxu0 %v883
      %900 = vmatprep.subr.bf16.mxu0 0
      %901 = vmatpush1.bf16.msra.mxu0 0
      %902 = vmatprep.subr.bf16.mxu0 0
      %903 = vmatpush1.bf16.msra.mxu0 0
      %904 = vmatprep.subr.bf16.mxu0 0
      %905 = vmatpush1.bf16.msra.mxu0 0
      %906 = vmatprep.subr.bf16.mxu0 0
      %907 = vmatpush1.bf16.msra.mxu0 0
      %908 = vmatprep.subr.bf16.mxu0 0
      %909 = vmatpush1.bf16.msra.mxu0 0
      %910 = vmatprep.subr.bf16.mxu0 0
      %911 = vmatpush1.bf16.msra.mxu0 0
      %912 = vmatprep.subr.bf16.mxu0 0
      %913 = vmatpush1.bf16.msra.mxu0 0
      %914 = vmatprep.subr.bf16.mxu0 0
      %915 = vmatpush1.bf16.msra.mxu0 0
      %916 = vmatprep.mubr.bf16.mxu0 0
      %917 = vmatmul.mubr.bf16.gmra.mrb[0].mxu0 %v513
      %v918 = vpop.f32.mrb[0].mxu0
      %v919 = vadd.f32 0.0, %v918
      %v920 = vpop.f32.mrb[0].mxu0
      %v921 = vpop.f32.mrb[0].mxu0
      %v922 = vadd.f32 0.0, %v921
      %v923 = vpop.f32.mrb[0].mxu0
      %924 = vmatprep.mubr.bf16.mxu0 0
      %925 = vmatmul.mubr.bf16.gmra.mrb[0].mxu0 %v514
      %v926 = vpop.f32.mrb[0].mxu0
      %v927 = vadd.f32 0.0, %v926
      %v928 = vpop.f32.mrb[0].mxu0
      %v929 = vpop.f32.mrb[0].mxu0
      %v930 = vadd.f32 0.0, %v929
      %v931 = vpop.f32.mrb[0].mxu0
      %932 = vdwg.mxu0
      %v933 = vadd.f32 %v872, %v919
      %v934 = vadd.f32 %v873, %v922
      %v935 = vadd.f32 %v874, %v927
      %v936 = vadd.f32 %v875, %v930
      %937 = vst [vmem:[#allocation5] sm:$0xff] %v933
      %938 = vst [vmem:[#allocation5 + $0x8] sm:$0xff] %v934
      %939 = vst [vmem:[#allocation5 + $0x10] sm:$0xff] %v935
      %940 = vst [vmem:[#allocation5 + $0x18] sm:$0xff] %v936
      %941 = vst [vmem:[#allocation3] sm:$0x1] %v779
      // Predicated region
      $region45: #{self_attention_pallas.1} parent=39 // pred_check
        %p942 = pneg %p296
      $region46: #{self_attention_pallas.1} parent=39 // pred_check_branch
        %944 = sbr.rel (%p942) target = $region48
      $region47: #{self_attention_pallas.1} parent=39 // pred_region
        %v945 = vld [vmem:[#allocation4] sm:$0x1]
        %v946 = vrcp.pop %v945
        %v947 = vmul.f32 %v945, %v946
        %v948 = vsub.f32 2.0, %v947
        %v949 = vmul.f32 %v946, %v948
        %v950 = vld [vmem:[#allocation5] sm:$0xff]
        %v951 = vld [vmem:[#allocation5 + $0x8] sm:$0xff]
        %v952 = vld [vmem:[#allocation5 + $0x10] sm:$0xff]
        %v953 = vld [vmem:[#allocation5 + $0x18] sm:$0xff]
        %v955 = vlaneseq
        %v956 = vshrl.u32 %v955, 7
        %v957 = vsub.s32 0, %v956
        %v958 = vrot.slane %v949, %v957
        %v960 = vmul.f32 %v950, %v958
        %v961 = vmul.f32 %v951, %v958
        %v962 = vmul.f32 %v952, %v958
        %v963 = vmul.f32 %v953, %v958
        %s964 = sld [smem:[#allocation6]]
        %v965 = vld [vmem:[%s286] sm:$0xff]
        %v966 = vld [vmem:[%s286 + $0x8] sm:$0xff]
        %v967 = vld [vmem:[%s286 + $0x10] sm:$0xff]
        %v968 = vld [vmem:[%s286 + $0x18] sm:$0xff]
        %v969 = vstv %s964
        %v970 = vmul.f32 %v969, %v960
        %v971 = vmul.f32 %v969, %v961
        %v972 = vmul.f32 %v969, %v962
        %v973 = vmul.f32 %v969, %v963
        %v974 = vadd.f32 %v970, %v965
        %v975 = vadd.f32 %v971, %v966
        %v976 = vadd.f32 %v972, %v967
        %v977 = vadd.f32 %v973, %v968
        %978 = vst [vmem:[%s294] sm:$0xff] %v974
        %979 = vst [vmem:[%s294 + $0x8] sm:$0xff] %v975
        %980 = vst [vmem:[%s294 + $0x10] sm:$0xff] %v976
        %981 = vst [vmem:[%s294 + $0x18] sm:$0xff] %v977
      $region48: #{self_attention_pallas.1} parent=39 // pred_fallthru
        _
      %p982 = scmp.lt.s32.totalorder %s22, 1
      %s983 = scalar_select %p982, %s22, 1
      %p984 = scmp.lt.s32.totalorder %s23, 0
      %s985 = scalar_select %p984, %s23, 0
      %s986 = smul.addr %s983, 4
      %s987 = sadd.s32 %s985, %s986
      %s988 = smul.addr %s987, 8
      %s989 = scalar_lea.vmem %s5, %s988
      // Predicated region
      $region49: #{self_attention_pallas.1} parent=39 // pred_check
        %p990 = pneg %p175
      $region50: #{self_attention_pallas.1} parent=39 // pred_check_branch
        %992 = sbr.rel (%p990) target = $region52
      $region51: #{self_attention_pallas.1} parent=39 // pred_region
        _
      $region52: #{self_attention_pallas.1} parent=39 // pred_fallthru
        _
    $region40: #{self_attention_pallas.1} parent=5 // pred_fallthru
      _
    %p993 = scmp.le.s32.totalorder 2, %s12
    // Predicated region
    $region53: #{self_attention_pallas.1} parent=5 // pred_check
      %p994 = pneg %p993
    $region54: #{self_attention_pallas.1} parent=5 // pred_check_branch
      %996 = sbr.rel (%p994) target = $region56
    $region55: #{self_attention_pallas.1} parent=5 // pred_region
      %s997 = ssub.s32 %s12, 2
      // Predicated region
      $region57: #{self_attention_pallas.1} parent=55 // pred_check
        %p998 = pneg %p181
      $region58: #{self_attention_pallas.1} parent=55 // pred_check_branch
        %1000 = sbr.rel (%p998) target = $region60
      $region59: #{self_attention_pallas.1} parent=55 // pred_region
        %p1001 = scmp.lt.s32.totalorder %s25, 1
        %s1002 = scalar_select %p1001, %s25, 1
        %p1003 = scmp.lt.s32.totalorder %s26, 0
        %s1004 = scalar_select %p1003, %s26, 0
        %s1005 = smul.addr %s1002, 4
        %s1006 = sadd.s32 %s1004, %s1005
        %s1007 = smul.addr %s1006, 8
        %s1008 = scalar_lea.vmem %s5, %s1007
      $region60: #{self_attention_pallas.1} parent=55 // pred_fallthru
        _
    $region56: #{self_attention_pallas.1} parent=5 // pred_fallthru
      _
  $region6: #{self_attention_pallas.1} parent=0 // loop_footer
    %s16 = sadd.s32 1, %s12
  $region7: #{self_attention_pallas.1} parent=0 // loop_footer_branch
    %11 = sbr.rel target = $region3
  $region8: #{self_attention_pallas.1} parent=0 // loop_exit
    _

</llo_original>
